<compile_context>
chip_gen: v7x
topology: tpu7x:2x2x1
jax: 0.10.0
libtpu: 0.0.40
codegen_flags: <defaults>
</compile_context>

<pallas_src>
import math

import jax
import jax.numpy as jnp
from jax.experimental import pallas as pl
from jax.experimental.pallas import tpu as pltpu

_LANE = 128       # lane-dense last dim (full vreg width, unmasked vst)
_TM_MAX = 1024    # 1024 rows * 128 lanes * 4 B = 512 KiB per int32 tile;
                  # double-buffered in+out ~= 2 MiB total -> fits every
                  # generation (v5e default scoped VMEM is 16 MiB).
_MIN_STEPS = 8    # target >= 8 grid steps for pipelining / megacore sharding


def _round_up(x, m):
    return ((x + m - 1) // m) * m


def _cdiv(a, b):
    return -(-a // b)


def _add_kernel(add_ref, x_ref, o_ref):
    # add_ref is a (1,) SMEM scalar; the VPU add is never the bottleneck here
    # (the kernel is pure HBM streaming), so a scalar operand costs nothing.
    o_ref[...] = x_ref[...] + add_ref[0].astype(x_ref.dtype)


def _launch(x2d, add_arr):
    rows, _ = x2d.shape
    if rows <= 8:
        # Tiny input: single full-array block (block == full array dims is
        # always legal regardless of (8,128) alignment).
        tm = rows
        grid_m = 1
    else:
        # Cap the tile so we get multiple grid steps; 512-1024-row tiles are
        # already past the HBM-roofline knee, bigger only adds VMEM pressure.
        tm = min(_TM_MAX, _round_up(_cdiv(rows, _MIN_STEPS), 8))
        grid_m = _cdiv(rows, tm)   # partial edge block is handled by Pallas

    return pl.pallas_call(
        _add_kernel,
        out_shape=jax.ShapeDtypeStruct((rows, _LANE), x2d.dtype),
        grid=(grid_m,),
        in_specs=[
            pl.BlockSpec(memory_space=pltpu.MemorySpace.SMEM),  # add_value
            pl.BlockSpec((tm, _LANE), lambda i: (i, 0)),        # idx tile
        ],
        out_specs=pl.BlockSpec((tm, _LANE), lambda i: (i, 0)),
        compiler_params=pltpu.CompilerParams(
            dimension_semantics=("parallel",),
        ),
    )(add_arr, x2d)


def dummy_gpt_forward(idx, add_value=1):
    """Pallas implementation of DummyGPT.forward: returns (idx + add_value, None)."""
    orig_shape = idx.shape
    n = math.prod(orig_shape)
    if n == 0:
        return idx, None

    scalar_dtype = jnp.float32 if jnp.issubdtype(idx.dtype, jnp.floating) else jnp.int32
    add_arr = jnp.asarray(add_value, dtype=scalar_dtype).reshape((1,))

    if n % _LANE == 0:
        # Fast path: reshape to (rows, 128) is metadata-only; no pad, no slice.
        rows = n // _LANE
        out2d = _launch(idx.reshape(rows, _LANE), add_arr)
        out = out2d.reshape(orig_shape)
    else:
        # Ragged n: pad only up to the next full 128-lane row.
        # TODO(synk): for huge ragged inputs this pad/slice still costs an extra
        # HBM pass; a split bulk/tail launch would remove it.
        rows = _cdiv(n, _LANE)
        flat = jnp.pad(jnp.ravel(idx), (0, rows * _LANE - n))
        out2d = _launch(flat.reshape(rows, _LANE), add_arr)
        out = out2d.reshape(-1)[:n].reshape(orig_shape)

    return out, None


if __name__ == "__main__":
    key = jax.random.PRNGKey(0)

    # Small shape consistent with the module's forward (token indices).
    batch, seq, vocab = 2, 8, 32
    idx = jax.random.randint(key, (batch, seq), 0, vocab, dtype=jnp.int32)
    out, aux = dummy_gpt_forward(idx, add_value=1)
    out = jax.block_until_ready(out)
    assert aux is None
    assert out.shape == idx.shape and out.dtype == idx.dtype
    assert bool(jnp.all(out == idx + 1))

    # Fast (no-pad) path: n divisible by 128.
    idx2 = jax.random.randint(key, (2, 128), 0, vocab, dtype=jnp.int32)
    out2, aux2 = dummy_gpt_forward(idx2, add_value=3)
    out2 = jax.block_until_ready(out2)
    assert aux2 is None
    assert bool(jnp.all(out2 == idx2 + 3))

    # Gridded path (rows > 8 -> multiple grid steps).
    idx3 = jax.random.randint(key, (4, 512), 0, vocab, dtype=jnp.int32)
    out3, aux3 = dummy_gpt_forward(idx3, add_value=2)
    out3 = jax.block_until_ready(out3)
    assert aux3 is None
    assert bool(jnp.all(out3 == idx3 + 2))

    print("KERNEL_OK")
</pallas_src>

<mosaic_0001>
module attributes {stable_mosaic.version = 11 : i64} {
  func.func @_add_kernel(%arg0: i32, %arg1: memref<1xi32, #tpu.memory_space<smem>>, %arg2: memref<1x128xi32, #tpu.memory_space<vmem>>, %arg3: memref<1x128xi32, #tpu.memory_space<vmem>>) attributes {dimension_semantics = [#tpu.dimension_semantics<parallel>], iteration_bounds = array<i64: 1>, scalar_prefetch = 0 : i64, scratch_operands = 0 : i64, tpu.core_type = #tpu.core_type<tc>, window_params = [{transform_indices = @transform_0, window_bounds = array<i64: 1>}, {transform_indices = @transform_1, window_bounds = array<i64: 1, 128>}, {transform_indices = @transform_2, window_bounds = array<i64: 1, 128>}]} {
    %c0 = arith.constant 0 : index
    %c0_0 = arith.constant 0 : index
    %0 = vector.load %arg2[%c0, %c0_0] : memref<1x128xi32, #tpu.memory_space<vmem>>, vector<1x128xi32>
    %c0_1 = arith.constant 0 : index
    %1 = memref.load %arg1[%c0_1] : memref<1xi32, #tpu.memory_space<smem>>
    %2 = vector.broadcast %1 : i32 to vector<1x128xi32>
    %3 = arith.addi %0, %2 : vector<1x128xi32>
    %c0_2 = arith.constant 0 : index
    %c0_3 = arith.constant 0 : index
    %4 = vector.load %arg3[%c0_2, %c0_3] : memref<1x128xi32, #tpu.memory_space<vmem>>, vector<1x128xi32>
    tpu.vector_store %arg3[%c0_2, %c0_3], %3 {strides = array<i32>} : memref<1x128xi32, #tpu.memory_space<vmem>>, vector<1x128xi32>,
    return
  }
  func.func @transform_0(%arg0: i32) -> i32 {
    %c0_i32 = arith.constant 0 : i32
    %c0_i32_0 = arith.constant 0 : i32
    return %c0_i32 : i32
  }
  func.func @transform_1(%arg0: i32) -> (i32, i32) {
    %c0_i32 = arith.constant 0 : i32
    %c0_i32_0 = arith.constant 0 : i32
    return %arg0, %c0_i32 : i32, i32
  }
  func.func @transform_2(%arg0: i32) -> (i32, i32) {
    %c0_i32 = arith.constant 0 : i32
    %c0_i32_0 = arith.constant 0 : i32
    return %arg0, %c0_i32 : i32, i32
  }
}

</mosaic_0001>

<llo_original>
// kernel: tpu_custom_call.1
$region0: #{tpu_custom_call.1}
  #allocation0 [shape = 'u32[]', space=smem, size = 0x4, offset = 0x4, fixed_abs, tag = 'smem constant byte address 0x4 - core index']
  #allocation1 [shape = 'u32[144,128]{1,0:T(1,128)}', space=vmem, size = 0x12000, scoped, tag = 'internal scratch']
  #allocation2 [shape = 's32[1]{0:T(128)S(6)}', space=smem, size = 0x200, scoped, tag = 'scoped memory for tpu_custom_call.1']
  %s0 = inlined_call_operand.<no memory space> [shape: s32[1], index: 0, kind: input, shape index: {}]
  %s1 = inlined_call_operand.vmem [shape: s32[1,128], index: 1, kind: input, shape index: {}]
  %s2 = inlined_call_operand.hbm [shape: s32[1,128], index: 2, kind: output, shape index: {}]
  %s3 = sld [smem:[#allocation0]]
  $region18: #{tpu_custom_call.1} parent=0
    _
  %s5 = ssub.s32 1, %s3
  %s6 = scalar_select 0, %s5, %s3
  %7 = sst [smem:[#allocation2]] %s0
  $region1: #{tpu_custom_call.1} parent=0
    #allocation3 [shape = 'u8[512]{0}', space=vmem, size = 0x400, scoped, tag = 'output window, operand 0, single buffered']
    #allocation4 [shape = 's32[1]{0}', space=sflag, size = 0x4, scoped, tag = 'scoped memory for tpu_custom_call.1']
    %8 = vsyncpa [#allocation4], 0
    // Predicated region
    $region2: #{tpu_custom_call.1} parent=1 // pred_check
      _
    $region3: #{tpu_custom_call.1} parent=1 // pred_check_branch
      %10 = sbr.rel (0) target = $region5
    $region4: #{tpu_custom_call.1} parent=1 // pred_region
      _
    $region5: #{tpu_custom_call.1} parent=1 // pred_fallthru
      _
    // Predicated region
    $region6: #{tpu_custom_call.1} parent=1 // pred_check
      _
    $region7: #{tpu_custom_call.1} parent=1 // pred_check_branch
      %12 = sbr.rel (0) target = $region9
    $region8: #{tpu_custom_call.1} parent=1 // pred_region
      _
    $region9: #{tpu_custom_call.1} parent=1 // pred_fallthru
      _
    %v13 = vld [vmem:[%s1] sm:$0x1]
    %s14 = sld [smem:[#allocation2]]
    %v15 = vstv %s14
    %v16 = vadd.s32 %v13, %v15
    %17 = vst [vmem:[#allocation3] sm:$0x1] %v16
    // Predicated region
    $region10: #{tpu_custom_call.1} parent=1 // pred_check
      _
    $region11: #{tpu_custom_call.1} parent=1 // pred_check_branch
      %19 = sbr.rel (0) target = $region13
    $region12: #{tpu_custom_call.1} parent=1 // pred_region
      %s21 = ssub.s32 16, 16
      %22 = vsyncadd [#allocation4], %s21
      %s24 = sshll.u32 [#allocation3], 4
      %s25 = int_to_ptr.vmem [resolvable:$true] %s24
      %27 = dma.vmem_to_hbm [thread:$0]  %s25, 16, %s2, [#allocation4]
    $region13: #{tpu_custom_call.1} parent=1 // pred_fallthru
      _
    // Predicated region
    $region14: #{tpu_custom_call.1} parent=1 // pred_check
      _
    $region15: #{tpu_custom_call.1} parent=1 // pred_check_branch
      %29 = sbr.rel (0) target = $region17
    $region16: #{tpu_custom_call.1} parent=1 // pred_region
      %30 = dma.done [#allocation4], 16
    $region17: #{tpu_custom_call.1} parent=1 // pred_fallthru
      _
    %31 = vsyncpa [#allocation4], 1

</llo_original>
